<compile_context>
chip_gen: v7x
topology: tpu7x:2x2x1
jax: 0.10.0
libtpu: 0.0.40
codegen_flags: <defaults>
</compile_context>

<pallas_src>
import functools

import jax
import jax.numpy as jnp
from jax.experimental import pallas as pl
from jax.experimental.pallas import tpu as pltpu


def _round_up(x, m):
    return (x + m - 1) // m * m


def _sq_err_partial_sum_kernel(pred_ref, tgt_ref, acc_ref, *, tb, ld):
    """One (tb, ld) lane-dense tile: accumulate unscaled squared errors."""
    t = pl.program_id(1)

    # Init the per-group accumulator (output block, resident across t).
    @pl.when(t == 0)
    def _():
        acc_ref[...] = jnp.zeros_like(acc_ref)

    d = pred_ref[...].astype(jnp.float32) - tgt_ref[...].astype(jnp.float32)
    sq = d * d
    # Collapse (tb, ld) -> (8, ld) with plain vector adds (sublane-aligned
    # split of the row axis), so the resident accumulator RMW is one vld + one
    # vst per tile rather than per vreg.
    acc_ref[...] += jnp.sum(sq.reshape(tb // 8, 8, ld), axis=0)


def forecast_aware_loss(predictions, targets, forecast_wind_speeds=None, *,
                        alpha=0.7, forecast_weight=0.3,
                        num_core_splits=1, lane_width=512,
                        target_tile_bytes=2 * 1024 * 1024):
    """Pallas implementation of ForecastAwareLoss.forward.

    predictions, targets: (B, F) arrays (any float dtype; math in f32).
    forecast_wind_speeds: optional (B,) array of forecast wind speeds.
    forecast_weight is kept for API parity; unused in the reference forward.
    """
    del forecast_weight  # unused by the reference forward pass
    B, F = predictions.shape
    N = B * F
    p_item = jnp.dtype(predictions.dtype).itemsize
    t_item = jnp.dtype(targets.dtype).itemsize

    # ---- lane-dense layout: flatten to (rows, LD), LD a multiple of 128 ----
    LD = lane_width if N >= lane_width else _round_up(N, 128)
    rows = pl.cdiv(N, LD)

    # ---- rows per tile: ~target_tile_bytes per streamed input, mult. of 8 --
    cap = max(8, (target_tile_bytes // (LD * max(p_item, t_item))) // 8 * 8)
    TB = max(8, min(_round_up(rows, 8), cap))

    tiles = pl.cdiv(rows, TB)
    NC = max(1, min(num_core_splits, tiles))   # independent partial-sum groups
    NT = pl.cdiv(tiles, NC)

    # ---- pad ONCE so the grid covers the arrays exactly: no edge-block
    #      garbage reads, phantom tiles read zeros and contribute nothing ----
    rows_pad = NC * NT * TB
    n_pad = rows_pad * LD
    pred_flat = predictions.reshape(-1)
    tgt_flat = targets.reshape(-1)
    if n_pad != N:
        pred_flat = jnp.pad(pred_flat, (0, n_pad - N))
        tgt_flat = jnp.pad(tgt_flat, (0, n_pad - N))
    pred2d = pred_flat.reshape(rows_pad, LD)
    tgt2d = tgt_flat.reshape(rows_pad, LD)

    # ---- explicit VMEM budget: 2 inputs x 2 pipeline buffers + accumulators
    #      + headroom for in-kernel f32 temporaries ----
    tile_bytes = TB * LD * (p_item + t_item)
    acc_bytes = NC * 8 * LD * 4
    budget = 2 * tile_bytes + 2 * acc_bytes + (8 << 20)
    vmem_limit = int(min(max(budget, 32 << 20), 48 << 20))

    kernel = functools.partial(_sq_err_partial_sum_kernel, tb=TB, ld=LD)

    acc = pl.pallas_call(
        kernel,
        out_shape=jax.ShapeDtypeStruct((NC, 8, LD), jnp.float32),
        grid_spec=pltpu.PrefetchScalarGridSpec(
            num_scalar_prefetch=0,
            grid=(NC, NT),
            in_specs=[
                pl.BlockSpec((TB, LD), lambda c, t: (c * NT + t, 0)),
                pl.BlockSpec((TB, LD), lambda c, t: (c * NT + t, 0)),
            ],
            # Output block doubles as the per-group accumulator: the same
            # block is revisited across the inner ("arbitrary") axis.
            out_specs=pl.BlockSpec((None, 8, LD), lambda c, t: (c, 0, 0)),
        ),
        compiler_params=pltpu.CompilerParams(
            dimension_semantics=("parallel", "arbitrary"),
            vmem_limit_bytes=vmem_limit),
        cost_estimate=pl.CostEstimate(
            flops=4 * n_pad, transcendentals=0,
            bytes_accessed=n_pad * (p_item + t_item) + NC * 8 * LD * 4),
    )(pred2d, tgt2d)

    # Tiny final reduce of the unscaled partial sums (scale once at the end:
    # better precision than pre-scaling each element).
    mse = jnp.sum(acc) / float(N)

    if forecast_wind_speeds is None:
        return mse

    # Forecast-alignment term touches only B of the B*F elements, so it is
    # decoupled from the lane-dense streaming kernel (per perf review) and
    # computed directly; cost is one strided read of column 0.
    fc = jnp.asarray(forecast_wind_speeds, dtype=jnp.float32).reshape(B)
    pred_wind = predictions[:, 0].astype(jnp.float32)
    align = jnp.sum((pred_wind - fc) ** 2) / float(B)
    return alpha * mse + (1.0 - alpha) * align


def _reference_loss(predictions, targets, forecast_wind_speeds=None, *,
                    alpha=0.7):
    p = predictions.astype(jnp.float32)
    t = targets.astype(jnp.float32)
    mse = jnp.mean((p - t) ** 2)
    if forecast_wind_speeds is None:
        return mse
    f = jnp.asarray(forecast_wind_speeds, dtype=jnp.float32)
    align = jnp.mean((p[:, 0] - f) ** 2)
    return alpha * mse + (1.0 - alpha) * align


if __name__ == "__main__":
    key = jax.random.PRNGKey(0)
    ks = jax.random.split(key, 10)

    # --- Case A: small f32 batch, with forecast (single lane-dense tile) ---
    B, F = 16, 4  # 16 samples, 4 predicted quantities (col 0 = wind speed)
    pred = jax.random.normal(ks[0], (B, F), dtype=jnp.float32)
    tgt = jax.random.normal(ks[1], (B, F), dtype=jnp.float32)
    fc = jax.random.normal(ks[2], (B,), dtype=jnp.float32) * 2.0 + 5.0

    loss = jax.block_until_ready(
        forecast_aware_loss(pred, tgt, fc, alpha=0.7, forecast_weight=0.3))
    ref = _reference_loss(pred, tgt, fc, alpha=0.7)
    assert jnp.allclose(loss, ref, rtol=1e-5, atol=1e-5), (loss, ref)

    # --- Case B: no forecast data (pure MSE path) ---
    loss_b = jax.block_until_ready(forecast_aware_loss(pred, tgt, None,
                                                       alpha=0.7))
    ref_b = _reference_loss(pred, tgt, None, alpha=0.7)
    assert jnp.allclose(loss_b, ref_b, rtol=1e-5, atol=1e-5), (loss_b, ref_b)

    # --- Case C: bf16 inputs, ragged flatten, multi-tile accumulation ---
    B2, F2 = 600, 8
    p2 = jax.random.normal(ks[3], (B2, F2), dtype=jnp.bfloat16)
    t2 = jax.random.normal(ks[4], (B2, F2), dtype=jnp.bfloat16)
    f2 = jax.random.normal(ks[5], (B2,), dtype=jnp.float32) * 2.0 + 5.0

    loss_c = jax.block_until_ready(
        forecast_aware_loss(p2, t2, f2, alpha=0.7, target_tile_bytes=8192))
    ref_c = _reference_loss(p2, t2, f2, alpha=0.7)
    assert jnp.allclose(loss_c, ref_c, rtol=1e-4, atol=1e-4), (loss_c, ref_c)

    # --- Case D: two partial-sum groups (outer "parallel" axis exercised) ---
    B3, F3 = 1024, 8
    p3 = jax.random.normal(ks[6], (B3, F3), dtype=jnp.float32)
    t3 = jax.random.normal(ks[7], (B3, F3), dtype=jnp.float32)
    f3 = jax.random.normal(ks[8], (B3,), dtype=jnp.float32) * 2.0 + 5.0

    loss_d = jax.block_until_ready(
        forecast_aware_loss(p3, t3, f3, alpha=0.7,
                            num_core_splits=2, target_tile_bytes=16384))
    ref_d = _reference_loss(p3, t3, f3, alpha=0.7)
    assert jnp.allclose(loss_d, ref_d, rtol=1e-5, atol=1e-5), (loss_d, ref_d)

    print("KERNEL_OK")
</pallas_src>

<mosaic_0001>
module attributes {stable_mosaic.version = 11 : i64} {
  func.func @_sq_err_partial_sum_kernel(%arg0: i32, %arg1: i32, %arg2: memref<8x128xf32, #tpu.memory_space<vmem>>, %arg3: memref<8x128xf32, #tpu.memory_space<vmem>>, %arg4: memref<1x8x128xf32, #tpu.memory_space<vmem>>) attributes {dimension_semantics = [#tpu.dimension_semantics<parallel>, #tpu.dimension_semantics<arbitrary>], iteration_bounds = array<i64: 1, 1>, scalar_prefetch = 0 : i64, scratch_operands = 0 : i64, tpu.core_type = #tpu.core_type<tc>, window_params = [{transform_indices = @transform_0, window_bounds = array<i64: 8, 128>}, {transform_indices = @transform_1, window_bounds = array<i64: 8, 128>}, {transform_indices = @transform_2, window_bounds = array<i64: 1, 8, 128>}]} {
    %c0_i32 = arith.constant 0 : i32
    %0 = arith.cmpi eq, %arg1, %c0_i32 : i32
    %1 = arith.extui %0 : i1 to i32
    %c0_i32_0 = arith.constant 0 : i32
    %2 = arith.cmpi ne, %1, %c0_i32_0 : i32
    scf.if %2 {
      %cst_10 = arith.constant 0.000000e+00 : f32
      %15 = vector.broadcast %cst_10 : f32 to vector<8x128xf32>
      %c0_11 = arith.constant 0 : index
      %c0_12 = arith.constant 0 : index
      %c0_13 = arith.constant 0 : index
      %16 = vector.load %arg4[%c0_11, %c0_12, %c0_13] : memref<1x8x128xf32, #tpu.memory_space<vmem>>, vector<1x8x128xf32>
      %17 = vector.shape_cast %16 : vector<1x8x128xf32> to vector<8x128xf32>
      %18 = vector.shape_cast %15 : vector<8x128xf32> to vector<1x8x128xf32>
      tpu.vector_store %arg4[%c0_11, %c0_12, %c0_13], %18 {strides = array<i32>} : memref<1x8x128xf32, #tpu.memory_space<vmem>>, vector<1x8x128xf32>,
    } else {
    }
    %c0 = arith.constant 0 : index
    %c0_1 = arith.constant 0 : index
    %3 = vector.load %arg2[%c0, %c0_1] : memref<8x128xf32, #tpu.memory_space<vmem>>, vector<8x128xf32>
    %c0_2 = arith.constant 0 : index
    %c0_3 = arith.constant 0 : index
    %4 = vector.load %arg3[%c0_2, %c0_3] : memref<8x128xf32, #tpu.memory_space<vmem>>, vector<8x128xf32>
    %5 = arith.subf %3, %4 : vector<8x128xf32>
    %6 = arith.mulf %5, %5 : vector<8x128xf32>
    %c0_4 = arith.constant 0 : index
    %c0_5 = arith.constant 0 : index
    %c0_6 = arith.constant 0 : index
    %7 = vector.load %arg4[%c0_4, %c0_5, %c0_6] : memref<1x8x128xf32, #tpu.memory_space<vmem>>, vector<1x8x128xf32>
    %8 = vector.shape_cast %7 : vector<1x8x128xf32> to vector<8x128xf32>
    %9 = vector.shape_cast %6 : vector<8x128xf32> to vector<1x8x128xf32>
    %cst = arith.constant dense<0.000000e+00> : vector<8x128xf32>
    %10 = vector.multi_reduction <add>, %9, %cst [0] : vector<1x8x128xf32> to vector<8x128xf32>
    %11 = arith.addf %8, %10 : vector<8x128xf32>
    %c0_7 = arith.constant 0 : index
    %c0_8 = arith.constant 0 : index
    %c0_9 = arith.constant 0 : index
    %12 = vector.load %arg4[%c0_7, %c0_8, %c0_9] : memref<1x8x128xf32, #tpu.memory_space<vmem>>, vector<1x8x128xf32>
    %13 = vector.shape_cast %12 : vector<1x8x128xf32> to vector<8x128xf32>
    %14 = vector.shape_cast %11 : vector<8x128xf32> to vector<1x8x128xf32>
    tpu.vector_store %arg4[%c0_7, %c0_8, %c0_9], %14 {strides = array<i32>} : memref<1x8x128xf32, #tpu.memory_space<vmem>>, vector<1x8x128xf32>,
    return
  }
  func.func @transform_0(%arg0: i32, %arg1: i32) -> (i32, i32) {
    %c1_i32 = arith.constant 1 : i32
    %0 = arith.muli %arg0, %c1_i32 : i32
    %1 = arith.addi %0, %arg1 : i32
    %c0_i32 = arith.constant 0 : i32
    %c0_i32_0 = arith.constant 0 : i32
    return %1, %c0_i32 : i32, i32
  }
  func.func @transform_1(%arg0: i32, %arg1: i32) -> (i32, i32) {
    %c1_i32 = arith.constant 1 : i32
    %0 = arith.muli %arg0, %c1_i32 : i32
    %1 = arith.addi %0, %arg1 : i32
    %c0_i32 = arith.constant 0 : i32
    %c0_i32_0 = arith.constant 0 : i32
    return %1, %c0_i32 : i32, i32
  }
  func.func @transform_2(%arg0: i32, %arg1: i32) -> (i32, i32, i32) {
    %c0_i32 = arith.constant 0 : i32
    %c0_i32_0 = arith.constant 0 : i32
    %c0_i32_1 = arith.constant 0 : i32
    return %arg0, %c0_i32, %c0_i32_0 : i32, i32, i32
  }
}

</mosaic_0001>

<llo_original>
// kernel: tpu_custom_call.1
$region0: #{tpu_custom_call.1}
  #allocation0 [shape = 'u32[]', space=smem, size = 0x4, offset = 0x4, fixed_abs, tag = 'smem constant byte address 0x4 - core index']
  #allocation1 [shape = 'u32[144,128]{1,0:T(1,128)}', space=vmem, size = 0x12000, scoped, tag = 'internal scratch']
  %s0 = inlined_call_operand.hbm [shape: f32[8,128], index: 0, kind: input, shape index: {}]
  %s1 = inlined_call_operand.hbm [shape: f32[8,128], index: 1, kind: input, shape index: {}]
  %s2 = inlined_call_operand.hbm [shape: f32[1,8,128], index: 2, kind: output, shape index: {}]
  %s3 = sld [smem:[#allocation0]]
  $region30: #{tpu_custom_call.1} parent=0
    _
  %s5 = ssub.s32 1, %s3
  %s6 = scalar_select 0, %s5, %s3
  $region1: #{tpu_custom_call.1} parent=0
    #allocation2 [shape = 'u8[4096]{0}', space=vmem, size = 0x1000, scoped, tag = 'input window, operand 0, single buffered']
    #allocation3 [shape = 's32[1]{0}', space=sflag, size = 0x4, scoped, tag = 'scoped memory for tpu_custom_call.1']
    #allocation4 [shape = 's32[1]{0}', space=sflag, size = 0x4, scoped, tag = 'scoped memory for tpu_custom_call.1']
    #allocation5 [shape = 'u8[4096]{0}', space=vmem, size = 0x1000, scoped, tag = 'input window, operand 1, single buffered']
    #allocation6 [shape = 's32[1]{0}', space=sflag, size = 0x4, scoped, tag = 'scoped memory for tpu_custom_call.1']
    #allocation7 [shape = 'u8[4096]{0}', space=vmem, size = 0x1000, scoped, tag = 'output window, operand 0, single buffered']
    %7 = vsyncpa [#allocation3], 0
    %8 = vsyncpa [#allocation6], 0
    %9 = vsyncpa [#allocation4], 0
    // Predicated region
    $region2: #{tpu_custom_call.1} parent=1 // pred_check
      _
    $region3: #{tpu_custom_call.1} parent=1 // pred_check_branch
      %11 = sbr.rel (0) target = $region5
    $region4: #{tpu_custom_call.1} parent=1 // pred_region
      %s12 = sadd.s32 0, 0
      %s14 = ssub.s32 128, 128
      %15 = vsyncadd [#allocation3], %s14
      %s16 = smul.addr %s12, 128
      %s17 = scalar_lea.hbm %s0, %s16
      %s19 = sshll.u32 [#allocation2], 4
      %s20 = int_to_ptr.vmem [resolvable:$true] %s19
      %22 = dma.hbm_to_vmem [thread:$0]  %s17, 128, %s20, [#allocation3]
    $region5: #{tpu_custom_call.1} parent=1 // pred_fallthru
      _
    // Predicated region
    $region6: #{tpu_custom_call.1} parent=1 // pred_check
      _
    $region7: #{tpu_custom_call.1} parent=1 // pred_check_branch
      %24 = sbr.rel (0) target = $region9
    $region8: #{tpu_custom_call.1} parent=1 // pred_region
      %s25 = sadd.s32 0, 0
      %s27 = ssub.s32 128, 128
      %28 = vsyncadd [#allocation6], %s27
      %s29 = smul.addr %s25, 128
      %s30 = scalar_lea.hbm %s1, %s29
      %s32 = sshll.u32 [#allocation5], 4
      %s33 = int_to_ptr.vmem [resolvable:$true] %s32
      %35 = dma.hbm_to_vmem [thread:$0]  %s30, 128, %s33, [#allocation6]
    $region9: #{tpu_custom_call.1} parent=1 // pred_fallthru
      _
    // Predicated region
    $region10: #{tpu_custom_call.1} parent=1 // pred_check
      _
    $region11: #{tpu_custom_call.1} parent=1 // pred_check_branch
      %37 = sbr.rel (0) target = $region13
    $region12: #{tpu_custom_call.1} parent=1 // pred_region
      %38 = dma.done [#allocation3], 128
    $region13: #{tpu_custom_call.1} parent=1 // pred_fallthru
      _
    // Predicated region
    $region14: #{tpu_custom_call.1} parent=1 // pred_check
      _
    $region15: #{tpu_custom_call.1} parent=1 // pred_check_branch
      %40 = sbr.rel (0) target = $region17
    $region16: #{tpu_custom_call.1} parent=1 // pred_region
      %41 = dma.done [#allocation6], 128
    $region17: #{tpu_custom_call.1} parent=1 // pred_fallthru
      _
    %s42 = sadd.s32 0, 0
    %s43 = sadd.s32 0, 0
    %p44 = scmp.eq.s32.totalorder 0, 0
    // Predicated region
    $region18: #{tpu_custom_call.1} parent=1 // pred_check
      %p45 = pneg %p44
    $region19: #{tpu_custom_call.1} parent=1 // pred_check_branch
      %47 = sbr.rel (%p45) target = $region21
    $region20: #{tpu_custom_call.1} parent=1 // pred_region
      %48 = vst [vmem:[#allocation7] sm:$0xff] 0.0
    $region21: #{tpu_custom_call.1} parent=1 // pred_fallthru
      _
    %v49 = vld [vmem:[#allocation2] sm:$0xff]
    %v50 = vld [vmem:[#allocation5] sm:$0xff]
    %v51 = vsub.f32 %v49, %v50
    %v52 = vmul.f32 %v51, %v51
    %v53 = vld [vmem:[#allocation7] sm:$0xff]
    %v54 = vadd.f32 %v52, 0.0
    %v55 = vadd.f32 %v53, %v54
    %56 = vst [vmem:[#allocation7] sm:$0xff] %v55
    // Predicated region
    $region22: #{tpu_custom_call.1} parent=1 // pred_check
      _
    $region23: #{tpu_custom_call.1} parent=1 // pred_check_branch
      %58 = sbr.rel (0) target = $region25
    $region24: #{tpu_custom_call.1} parent=1 // pred_region
      %s60 = ssub.s32 128, 128
      %61 = vsyncadd [#allocation4], %s60
      %s63 = sshll.u32 [#allocation7], 4
      %s64 = int_to_ptr.vmem [resolvable:$true] %s63
      %66 = dma.vmem_to_hbm [thread:$0]  %s64, 128, %s2, [#allocation4]
    $region25: #{tpu_custom_call.1} parent=1 // pred_fallthru
      _
    // Predicated region
    $region26: #{tpu_custom_call.1} parent=1 // pred_check
      _
    $region27: #{tpu_custom_call.1} parent=1 // pred_check_branch
      %68 = sbr.rel (0) target = $region29
    $region28: #{tpu_custom_call.1} parent=1 // pred_region
      %69 = dma.done [#allocation4], 128
    $region29: #{tpu_custom_call.1} parent=1 // pred_fallthru
      _
    %70 = vsyncpa [#allocation3], 1
    %71 = vsyncpa [#allocation6], 1
    %72 = vsyncpa [#allocation4], 1

</llo_original>
